<compile_context>
chip_gen: v6e
topology: v6e:2x2x1
jax: 0.10.0
libtpu: 0.0.40
codegen_flags: <defaults>
</compile_context>

<pallas_src>
import functools

import jax
import jax.numpy as jnp
from jax.experimental import pallas as pl
from jax.experimental.pallas import tpu as pltpu


def _con_proximity_kernel(x_ref, c_ref, labels_ref, out_ref, acc_ref, *, num_classes):
    j = pl.program_id(0)
    n_tiles = pl.num_programs(0)

    @pl.when(j == 0)
    def _init():
        acc_ref[0, 0] = 0.0

    x = x_ref[...]                         # (B, D)  native dtype
    c = c_ref[...]                         # (TC, D) native dtype (streamed tile)
    labels = labels_ref[...]               # (B, 1)  int32

    b = x.shape[0]
    tile_c = c.shape[0]
    d = c.shape[1]

    # Contract over D with centers in native (C, D) layout (no explicit c.T),
    # f32 MXU accumulation.
    dn = (((1,), (1,)), ((), ()))
    xc = jax.lax.dot_general(
        x, c, dimension_numbers=dn, preferred_element_type=jnp.float32
    )                                      # (B, TC) f32

    # ||x||^2 per row with f32 accumulation.
    x32 = x.astype(jnp.float32)
    x_sq = jnp.sum(x32 * x32, axis=1, keepdims=True)          # (B, 1) f32

    # ||c||^2 as a lane-oriented (1, TC) row via the MXU (idle capacity here),
    # avoiding a sublane->lane relayout of a (TC, 1) column.
    ones_row = jnp.ones((1, d), dtype=c.dtype)
    c_sq = jax.lax.dot_general(
        ones_row, c * c, dimension_numbers=dn, preferred_element_type=jnp.float32
    )                                      # (1, TC) f32

    dist = x_sq + c_sq - 2.0 * xc          # (B, TC) f32
    # clamp before masking is equivalent to PyTorch's select-then-clamp since
    # masked entries are zeroed out of the sum either way.
    dist = jnp.clip(dist, 1e-12, 1.0e12)

    # Zero own-class entries; each labels[i] falls in exactly one C-tile.
    class_ids = jax.lax.broadcasted_iota(jnp.int32, dist.shape, 1) + j * tile_c
    dist = jnp.where(labels == class_ids, 0.0, dist)

    acc_ref[0, 0] += jnp.sum(dist)

    @pl.when(j == n_tiles - 1)
    def _finish():
        denom = jnp.float32(b * (num_classes - 1))
        out_ref[0, 0] = acc_ref[0, 0] / denom


def _pick_tile_c(c):
    # Prefer MXU-friendly tile widths (256 matches the v6e/v7x 2x256x256 MXU,
    # 128 the v5e 4x128x128 MXU); fall back to the full class dim otherwise.
    for t in (256, 128):
        if c % t == 0:
            return t
    return c


def con_proximity_loss(x, centers, labels, *, tile_c=None):
    """x: (B, D) float, centers: (C, D) float, labels: (B,) int -> scalar f32."""
    b, d = x.shape
    c, d2 = centers.shape
    assert d == d2
    labels2d = labels.astype(jnp.int32).reshape(b, 1)

    if tile_c is None:
        tile_c = _pick_tile_c(c)
    assert c % tile_c == 0
    n_tiles = c // tile_c

    kernel = functools.partial(_con_proximity_kernel, num_classes=c)

    itemsize = jnp.dtype(x.dtype).itemsize
    cost = pl.CostEstimate(
        flops=2 * b * c * d,
        transcendentals=0,
        bytes_accessed=(b * d + c * d) * itemsize + b * 4 + 4,
    )

    out = pl.pallas_call(
        kernel,
        out_shape=jax.ShapeDtypeStruct((1, 1), jnp.float32),
        grid_spec=pltpu.PrefetchScalarGridSpec(
            num_scalar_prefetch=0,
            grid=(n_tiles,),
            in_specs=[
                pl.BlockSpec((b, d), lambda j: (0, 0)),        # x, resident
                pl.BlockSpec((tile_c, d), lambda j: (j, 0)),   # centers, streamed
                pl.BlockSpec((b, 1), lambda j: (0, 0)),        # labels, tiny
            ],
            out_specs=pl.BlockSpec(memory_space=pltpu.MemorySpace.SMEM),
            scratch_shapes=[pltpu.SMEM((1, 1), jnp.float32)],
        ),
        compiler_params=pltpu.CompilerParams(
            dimension_semantics=("arbitrary",),   # reduction over C tiles
            vmem_limit_bytes=32 * 1024 * 1024,    # safe on v7x (64 MiB physical)
        ),
        cost_estimate=cost,
    )(x, centers, labels2d)
    return out[0, 0]


def _reference(x, centers, labels):
    x = x.astype(jnp.float32)
    centers = centers.astype(jnp.float32)
    b, _ = x.shape
    c, _ = centers.shape
    distmat = (
        jnp.sum(x * x, axis=1, keepdims=True)
        + jnp.sum(centers * centers, axis=1)[None, :]
        - 2.0 * x @ centers.T
    )
    distmat = jnp.clip(distmat, 1e-12, 1.0e12)
    mask = labels[:, None] == jnp.arange(c)[None, :]
    sel = jnp.where(mask, 0.0, distmat)
    return jnp.sum(sel) / (b * (c - 1))


if __name__ == "__main__":
    # Small shapes consistent with the module (num_classes, feat_dim scaled
    # down); num_classes=512 with tile_c=256 exercises the streamed C-grid.
    batch = 8
    num_classes = 512
    feat_dim = 256

    key = jax.random.PRNGKey(0)
    kx, kc, kl = jax.random.split(key, 3)

    x = jax.random.normal(kx, (batch, feat_dim), dtype=jnp.float32)
    # Deterministic "randn" init for the centers parameter (as in __init__).
    centers = jax.random.normal(kc, (num_classes, feat_dim), dtype=jnp.float32)
    labels = jax.random.randint(kl, (batch,), 0, num_classes, dtype=jnp.int32)

    loss = jax.block_until_ready(con_proximity_loss(x, centers, labels))

    ref = _reference(x, centers, labels)
    assert jnp.allclose(loss, ref, rtol=1e-4, atol=1e-4), (loss, ref)

    print("KERNEL_OK")
</pallas_src>

<mosaic_0001>
module attributes {stable_mosaic.version = 11 : i64} {
  func.func @_con_proximity_kernel(%arg0: i32, %arg1: memref<8x256xf32, #tpu.memory_space<vmem>>, %arg2: memref<256x256xf32, #tpu.memory_space<vmem>>, %arg3: memref<8x1xi32, #tpu.memory_space<vmem>>, %arg4: memref<1x1xf32, #tpu.memory_space<smem>>, %arg5: memref<1x1xf32, #tpu.memory_space<smem>>) attributes {dimension_semantics = [#tpu.dimension_semantics<arbitrary>], iteration_bounds = array<i64: 2>, scalar_prefetch = 0 : i64, scratch_operands = 1 : i64, tpu.core_type = #tpu.core_type<tc>, window_params = [{pipeline_mode = #tpu.pipeline_mode<synchronous>, transform_indices = @transform_0, window_bounds = array<i64: 8, 256>}, {transform_indices = @transform_1, window_bounds = array<i64: 256, 256>}, {pipeline_mode = #tpu.pipeline_mode<synchronous>, transform_indices = @transform_2, window_bounds = array<i64: 8, 1>}, {transform_indices = @transform_3, window_bounds = array<i64: 1, 1>}]} {
    %c0_i32 = arith.constant 0 : i32
    %0 = arith.cmpi eq, %arg0, %c0_i32 : i32
    %1 = arith.extui %0 : i1 to i32
    %c0_i32_0 = arith.constant 0 : i32
    %2 = arith.cmpi ne, %1, %c0_i32_0 : i32
    scf.if %2 {
      %cst_19 = arith.constant 0.000000e+00 : f32
      %c0_20 = arith.constant 0 : index
      %c0_21 = arith.constant 0 : index
      %41 = memref.load %arg5[%c0_20, %c0_21] : memref<1x1xf32, #tpu.memory_space<smem>>
      memref.store %cst_19, %arg5[%c0_20, %c0_21] : memref<1x1xf32, #tpu.memory_space<smem>>
    } else {
    }
    %c0 = arith.constant 0 : index
    %c0_1 = arith.constant 0 : index
    %3 = vector.load %arg1[%c0, %c0_1] : memref<8x256xf32, #tpu.memory_space<vmem>>, vector<8x256xf32>
    %c0_2 = arith.constant 0 : index
    %c0_3 = arith.constant 0 : index
    %4 = vector.load %arg2[%c0_2, %c0_3] : memref<256x256xf32, #tpu.memory_space<vmem>>, vector<256x256xf32>
    %c0_4 = arith.constant 0 : index
    %c0_5 = arith.constant 0 : index
    %5 = vector.load %arg3[%c0_4, %c0_5] : memref<8x1xi32, #tpu.memory_space<vmem>>, vector<8x1xi32>
    %cst = arith.constant dense<0.000000e+00> : vector<8x256xf32>
    %6 = tpu.matmul %3, %4, %cst {dimension_numbers = #tpu.dot_dimension_numbers<[1], [1], [0], [0], [0, 0, 1, 0], [], []>} : vector<8x256xf32>, vector<256x256xf32>, vector<8x256xf32> -> vector<8x256xf32>
    %7 = arith.mulf %3, %3 : vector<8x256xf32>
    %cst_6 = arith.constant dense<0.000000e+00> : vector<8xf32>
    %8 = vector.multi_reduction <add>, %7, %cst_6 [1] : vector<8x256xf32> to vector<8xf32>
    %9 = vector.shape_cast %8 : vector<8xf32> to vector<8x1xf32>
    %cst_7 = arith.constant 1.000000e+00 : f32
    %10 = vector.broadcast %cst_7 : f32 to vector<1x256xf32>
    %11 = arith.mulf %4, %4 : vector<256x256xf32>
    %cst_8 = arith.constant dense<0.000000e+00> : vector<1x256xf32>
    %12 = tpu.matmul %10, %11, %cst_8 {dimension_numbers = #tpu.dot_dimension_numbers<[1], [1], [0], [0], [0, 0, 1, 0], [], []>} : vector<1x256xf32>, vector<256x256xf32>, vector<1x256xf32> -> vector<1x256xf32>
    %13 = vector.broadcast %9 : vector<8x1xf32> to vector<8x256xf32>
    %14 = vector.broadcast %12 : vector<1x256xf32> to vector<8x256xf32>
    %15 = arith.addf %13, %14 : vector<8x256xf32>
    %cst_9 = arith.constant 2.000000e+00 : f32
    %16 = vector.broadcast %cst_9 : f32 to vector<8x256xf32>
    %17 = arith.mulf %16, %6 : vector<8x256xf32>
    %18 = arith.subf %15, %17 : vector<8x256xf32>
    %cst_10 = arith.constant 9.99999996E-13 : f32
    %cst_11 = arith.constant 9.99999995E+11 : f32
    %19 = vector.broadcast %cst_10 : f32 to vector<8x256xf32>
    %20 = arith.maximumf %19, %18 : vector<8x256xf32>
    %21 = vector.broadcast %cst_11 : f32 to vector<8x256xf32>
    %22 = arith.minimumf %21, %20 : vector<8x256xf32>
    %23 = tpu.iota {dimensions = array<i32: 1>} : vector<8x256xi32>
    %c256_i32 = arith.constant 256 : i32
    %24 = arith.muli %arg0, %c256_i32 : i32
    %25 = vector.broadcast %24 : i32 to vector<8x256xi32>
    %26 = arith.addi %23, %25 : vector<8x256xi32>
    %27 = vector.broadcast %5 : vector<8x1xi32> to vector<8x256xi32>
    %28 = arith.cmpi eq, %27, %26 : vector<8x256xi32>
    %cst_12 = arith.constant 0.000000e+00 : f32
    %29 = vector.broadcast %cst_12 : f32 to vector<8x256xf32>
    %30 = arith.select %28, %29, %22 : vector<8x256xi1>, vector<8x256xf32>
    %c0_13 = arith.constant 0 : index
    %c0_14 = arith.constant 0 : index
    %31 = memref.load %arg5[%c0_13, %c0_14] : memref<1x1xf32, #tpu.memory_space<smem>>
    %32 = vector.shape_cast %30 : vector<8x256xf32> to vector<1x8x256xf32>
    %cst_15 = arith.constant dense<0.000000e+00> : vector<1xf32>
    %33 = vector.multi_reduction <add>, %32, %cst_15 [1, 2] : vector<1x8x256xf32> to vector<1xf32>
    %34 = vector.shape_cast %33 : vector<1xf32> to vector<1x1x1xf32>
    %35 = vector.extract %34[0, 0, 0] : f32 from vector<1x1x1xf32>
    %36 = arith.addf %31, %35 : f32
    %c0_16 = arith.constant 0 : index
    %c0_17 = arith.constant 0 : index
    %37 = memref.load %arg5[%c0_16, %c0_17] : memref<1x1xf32, #tpu.memory_space<smem>>
    memref.store %36, %arg5[%c0_16, %c0_17] : memref<1x1xf32, #tpu.memory_space<smem>>
    %c1_i32 = arith.constant 1 : i32
    %38 = arith.cmpi eq, %arg0, %c1_i32 : i32
    %39 = arith.extui %38 : i1 to i32
    %c0_i32_18 = arith.constant 0 : i32
    %40 = arith.cmpi ne, %39, %c0_i32_18 : i32
    scf.if %40 {
      %c0_19 = arith.constant 0 : index
      %c0_20 = arith.constant 0 : index
      %41 = memref.load %arg5[%c0_19, %c0_20] : memref<1x1xf32, #tpu.memory_space<smem>>
      %cst_21 = arith.constant 4.088000e+03 : f32
      %42 = arith.divf %41, %cst_21 : f32
      %c0_22 = arith.constant 0 : index
      %c0_23 = arith.constant 0 : index
      %43 = memref.load %arg4[%c0_22, %c0_23] : memref<1x1xf32, #tpu.memory_space<smem>>
      memref.store %42, %arg4[%c0_22, %c0_23] : memref<1x1xf32, #tpu.memory_space<smem>>
    } else {
    }
    return
  }
  func.func @transform_0(%arg0: i32) -> (i32, i32) {
    %c0_i32 = arith.constant 0 : i32
    %c0_i32_0 = arith.constant 0 : i32
    %c0_i32_1 = arith.constant 0 : i32
    return %c0_i32, %c0_i32_0 : i32, i32
  }
  func.func @transform_1(%arg0: i32) -> (i32, i32) {
    %c0_i32 = arith.constant 0 : i32
    %c0_i32_0 = arith.constant 0 : i32
    return %arg0, %c0_i32 : i32, i32
  }
  func.func @transform_2(%arg0: i32) -> (i32, i32) {
    %c0_i32 = arith.constant 0 : i32
    %c0_i32_0 = arith.constant 0 : i32
    %c0_i32_1 = arith.constant 0 : i32
    return %c0_i32, %c0_i32_0 : i32, i32
  }
  func.func @transform_3(%arg0: i32) -> (i32, i32) {
    %c0_i32 = arith.constant 0 : i32
    %c0_i32_0 = arith.constant 0 : i32
    %c0_i32_1 = arith.constant 0 : i32
    return %c0_i32, %c0_i32_0 : i32, i32
  }
}

</mosaic_0001>

<llo_original>
// kernel: tpu_custom_call.1
$region0: #{tpu_custom_call.1}
  #allocation0 [shape = 'u32[]', space=smem, size = 0x4, offset = 0x4, fixed_abs, tag = 'smem constant byte address 0x4 - core index']
  #allocation1 [shape = 'u32[144,128]{1,0:T(1,128)}', space=vmem, size = 0x12000, scoped, tag = 'internal scratch']
  #allocation2 [shape = 'f32[1,1]{1,0:T(1,128)}', space=smem, size = 0x200, scoped, tag = 'scratch operand']
  %s0 = inlined_call_operand.hbm [shape: f32[8,256], index: 0, kind: input, shape index: {}]
  %s1 = inlined_call_operand.hbm [shape: f32[512,256], index: 1, kind: input, shape index: {}]
  %s2 = inlined_call_operand.vmem [shape: s32[8,1], index: 2, kind: input, shape index: {}]
  %s3 = inlined_call_operand.hbm [shape: f32[1,1], index: 3, kind: output, shape index: {}]
  %s4 = sld [smem:[#allocation0]]
  $region61: #{tpu_custom_call.1} parent=0
    _
  %s6 = ssub.s32 1, %s4
  %s7 = scalar_select 0, %s6, %s4
  $region1: #{tpu_custom_call.1} parent=0
    #allocation3 [shape = 'u8[8192]{0}', space=vmem, size = 0x2000, scoped, tag = 'input window, operand 0, single buffered']
    #allocation4 [shape = 's32[2]{0}', space=sflag, size = 0x8, scoped, tag = 'scoped memory for tpu_custom_call.1']
    #allocation5 [shape = 's32[2]{0}', space=sflag, size = 0x8, scoped, tag = 'scoped memory for tpu_custom_call.1']
    #allocation6 [shape = 'u8[524288]{0}', space=vmem, size = 0x80000, scoped, tag = 'input window, operand 1']
    #allocation7 [shape = 's32[2]{0}', space=sflag, size = 0x8, scoped, tag = 'scoped memory for tpu_custom_call.1']
    #allocation8 [shape = 'u8[512]{0}', space=smem, size = 0x200, scoped, tag = 'output window, operand 0, single buffered']
    %8 = vsyncpa [#allocation4], 0
    %9 = vsyncpa [#allocation7], 0
    %s10 = scalar_lea.sflag [#allocation7], 1
    %11 = vsyncpa %s10, 0
    %12 = vsyncpa [#allocation5], 0
    loop: start=0, step=1, limit=4
    $region2: #{tpu_custom_call.1} parent=1 // loop_pre_header
      _
    $region3: #{tpu_custom_call.1} parent=1 // loop_header
      %s14 = sphi 0, %s18
      %p15 = scmp.ge.s32.totalorder %s14, 4
      %s22 = sphi 0, %s22
      %s24 = sphi 0, %s22
      %s25 = sphi 0, %s24
      %s39 = sphi 0, %s25
      %s45 = sphi 0, %s47
      %s48 = sphi 0, %s45
      %s49 = sphi 0, %s48
      %s65 = sphi 0, %s49
      %s69 = sphi 0, %s69
      %s71 = sphi 0, %s69
      %s72 = sphi 0, %s71
      %s86 = sphi 0, %s72
      %s90 = sphi 0, %s90
      %s92 = sphi 0, %s90
      %s93 = sphi 0, %s92
      %s107 = sphi 0, %s93
    $region4: #{tpu_custom_call.1} parent=1 // loop_header_branch
      %17 = sbr.rel (%p15) target = $region8
    $region5: #{tpu_custom_call.1} parent=1 // loop_body
      %s19 = ssub.s32 %s14, 1
      %s20 = ssub.s32 %s14, 2
      %s21 = sadd.s32 %s14, 1
      %s23 = sadd.s32 %s22, 1
      %p26 = scmp.eq.s32.totalorder %s14, 1
      %p27 = scmp.ne.s32.totalorder %s22, %s24
      %p28 = scmp.eq.s32.totalorder %s14, 0
      %p29 = por %p27, %p28
      %p30 = scmp.ne.s32.totalorder %s22, %s24
      %p31 = scmp.eq.s32.totalorder %s19, 1
      %p32 = por %p30, %p31
      %p33 = scmp.ne.s32.totalorder %s24, %s25
      %p34 = scmp.eq.s32.totalorder %s19, 0
      %p35 = por %p33, %p34
      %p36 = scmp.ne.s32.totalorder %s24, %s25
      %p37 = scmp.eq.s32.totalorder %s20, 1
      %p38 = por %p36, %p37
      %p40 = scmp.ne.s32.totalorder %s25, %s39
      %p41 = scmp.eq.s32.totalorder %s20, 0
      %p42 = por %p40, %p41
      %s43 = ssub.s32 %s14, %s21
      %p44 = scmp.eq.s32.totalorder %s43, 0
      %s46 = sadd.s32 %s45, 1
      %s47 = scalar_select %p44, %s45, %s46
      %p50 = pneg %p44
      %p51 = scmp.eq.s32.totalorder %s14, 1
      %p52 = por %p50, %p51
      %p53 = scmp.ne.s32.totalorder %s45, %s48
      %p54 = scmp.eq.s32.totalorder %s14, 0
      %p55 = por %p53, %p54
      %p56 = scmp.ne.s32.totalorder %s45, %s48
      %p57 = scmp.eq.s32.totalorder %s19, 1
      %p58 = por %p56, %p57
      %p59 = scmp.ne.s32.totalorder %s48, %s49
      %p60 = scmp.eq.s32.totalorder %s19, 0
      %p61 = por %p59, %p60
      %p62 = scmp.ne.s32.totalorder %s48, %s49
      %p63 = scmp.eq.s32.totalorder %s20, 1
      %p64 = por %p62, %p63
      %p66 = scmp.ne.s32.totalorder %s49, %s65
      %p67 = scmp.eq.s32.totalorder %s20, 0
      %p68 = por %p66, %p67
      %s70 = sadd.s32 %s69, 1
      %p73 = scmp.eq.s32.totalorder %s14, 1
      %p74 = scmp.ne.s32.totalorder %s69, %s71
      %p75 = scmp.eq.s32.totalorder %s14, 0
      %p76 = por %p74, %p75
      %p77 = scmp.ne.s32.totalorder %s69, %s71
      %p78 = scmp.eq.s32.totalorder %s19, 1
      %p79 = por %p77, %p78
      %p80 = scmp.ne.s32.totalorder %s71, %s72
      %p81 = scmp.eq.s32.totalorder %s19, 0
      %p82 = por %p80, %p81
      %p83 = scmp.ne.s32.totalorder %s71, %s72
      %p84 = scmp.eq.s32.totalorder %s20, 1
      %p85 = por %p83, %p84
      %p87 = scmp.ne.s32.totalorder %s72, %s86
      %p88 = scmp.eq.s32.totalorder %s20, 0
      %p89 = por %p87, %p88
      %s91 = sadd.s32 %s90, 1
      %p94 = scmp.eq.s32.totalorder %s14, 1
      %p95 = scmp.ne.s32.totalorder %s90, %s92
      %p96 = scmp.eq.s32.totalorder %s14, 0
      %p97 = por %p95, %p96
      %p98 = scmp.ne.s32.totalorder %s90, %s92
      %p99 = scmp.eq.s32.totalorder %s19, 1
      %p100 = por %p98, %p99
      %p101 = scmp.ne.s32.totalorder %s92, %s93
      %p102 = scmp.eq.s32.totalorder %s19, 0
      %p103 = por %p101, %p102
      %p104 = scmp.ne.s32.totalorder %s92, %s93
      %p105 = scmp.eq.s32.totalorder %s20, 1
      %p106 = por %p104, %p105
      %p108 = scmp.ne.s32.totalorder %s93, %s107
      %p109 = scmp.eq.s32.totalorder %s20, 0
      %p110 = por %p108, %p109
      %p111 = scmp.le.s32.totalorder 1, %s14
      %p112 = scmp.lt.s32.totalorder %s14, 3
      %p113 = pnand %p111, %p112
      %p114 = pneg %p113
      // Predicated region
      $region9: #{tpu_custom_call.1} parent=5 // pred_check
        _
      $region10: #{tpu_custom_call.1} parent=5 // pred_check_branch
        %116 = sbr.rel (%p113) target = $region12
      $region11: #{tpu_custom_call.1} parent=5 // pred_region
        %s117 = ssub.s32 %s14, 1
        // Predicated region
        $region13: #{tpu_custom_call.1} parent=11 // pred_check
          %p118 = pneg %p35
        $region14: #{tpu_custom_call.1} parent=11 // pred_check_branch
          %120 = sbr.rel (%p118) target = $region16
        $region15: #{tpu_custom_call.1} parent=11 // pred_region
          %s122 = ssub.s32 256, 256
          %123 = vsyncadd [#allocation4], %s122
          %s125 = sshll.u32 [#allocation3], 4
          %s126 = int_to_ptr.vmem [resolvable:$true] %s125
          %128 = dma.hbm_to_vmem [thread:$0]  %s0, 256, %s126, [#allocation4]
        $region16: #{tpu_custom_call.1} parent=11 // pred_fallthru
          _
        // Predicated region
        $region17: #{tpu_custom_call.1} parent=11 // pred_check
          %p129 = pneg %p82
        $region18: #{tpu_custom_call.1} parent=11 // pred_check_branch
          %131 = sbr.rel (%p129) target = $region20
        $region19: #{tpu_custom_call.1} parent=11 // pred_region
          _
        $region20: #{tpu_custom_call.1} parent=11 // pred_fallthru
          _
      $region12: #{tpu_custom_call.1} parent=5 // pred_fallthru
        _
      %p132 = scmp.lt.s32.totalorder %s14, 2
      // Predicated region
      $region21: #{tpu_custom_call.1} parent=5 // pred_check
        %p133 = pneg %p132
      $region22: #{tpu_custom_call.1} parent=5 // pred_check_branch
        %135 = sbr.rel (%p133) target = $region24
      $region23: #{tpu_custom_call.1} parent=5 // pred_region
        // Predicated region
        $region25: #{tpu_custom_call.1} parent=23 // pred_check
          %p136 = pneg %p55
        $region26: #{tpu_custom_call.1} parent=23 // pred_check_branch
          %138 = sbr.rel (%p136) target = $region28
        $region27: #{tpu_custom_call.1} parent=23 // pred_region
          %s139 = sand.u32 %s45, 1
          %s140 = scalar_lea.sflag [#allocation7], %s139
          %s141 = sand.u32 %s45, 1
          %s142 = smul.addr %s141, 512
          %s143 = scalar_lea.vmem [#allocation6], %s142
          %s144 = smul.u32 32, %s14
          %s146 = ssub.s32 8192, 8192
          %147 = vsyncadd %s140, %s146
          %s148 = smul.addr %s144, 2
          %s149 = smul.addr %s148, 128
          %s150 = scalar_lea.hbm %s1, %s149
          %s151 = sshll.u32 %s143, 4
          %s152 = int_to_ptr.vmem [resolvable:$true] %s151
          %157 = dma.hbm_to_vmem [thread:$0]  %s150, 8192, %s152, %s140, 256, 256, 16
        $region28: #{tpu_custom_call.1} parent=23 // pred_fallthru
          _
      $region24: #{tpu_custom_call.1} parent=5 // pred_fallthru
        _
      %p158 = scmp.le.s32.totalorder 1, %s14
      %p159 = scmp.lt.s32.totalorder %s14, 3
      %p160 = pnand %p158, %p159
      %p161 = pneg %p160
      // Predicated region
      $region29: #{tpu_custom_call.1} parent=5 // pred_check
        _
      $region30: #{tpu_custom_call.1} parent=5 // pred_check_branch
        %163 = sbr.rel (%p160) target = $region32
      $region31: #{tpu_custom_call.1} parent=5 // pred_region
        %s164 = ssub.s32 %s14, 1
        // Predicated region
        $region33: #{tpu_custom_call.1} parent=31 // pred_check
          %p165 = pneg %p35
        $region34: #{tpu_custom_call.1} parent=31 // pred_check_branch
          %167 = sbr.rel (%p165) target = $region36
        $region35: #{tpu_custom_call.1} parent=31 // pred_region
          %168 = dma.done [#allocation4], 256
        $region36: #{tpu_custom_call.1} parent=31 // pred_fallthru
          _
        %s169 = sand.u32 %s48, 1
        %s170 = scalar_lea.sflag [#allocation7], %s169
        %s171 = sand.u32 %s48, 1
        %s172 = smul.addr %s171, 512
        %s173 = scalar_lea.vmem [#allocation6], %s172
        // Predicated region
        $region37: #{tpu_custom_call.1} parent=31 // pred_check
          %p174 = pneg %p61
        $region38: #{tpu_custom_call.1} parent=31 // pred_check_branch
          %176 = sbr.rel (%p174) target = $region40
        $region39: #{tpu_custom_call.1} parent=31 // pred_region
          %177 = dma.done %s170, 8192
        $region40: #{tpu_custom_call.1} parent=31 // pred_fallthru
          _
        %p178 = pneg %p35
        %p179 = pneg %p32
        %s180 = sand.u32 %s48, 1
        %s181 = scalar_lea.sflag [#allocation7], %s180
        %s182 = sand.u32 %s48, 1
        %s183 = smul.addr %s182, 512
        %s184 = scalar_lea.vmem [#allocation6], %s183
        %p185 = pneg %p61
        %p186 = pneg %p58
        %p187 = pneg %p82
        %p188 = pneg %p79
        %p189 = pneg %p103
        %p190 = pneg %p100
        %s191 = smul.u32 32, %s19
        %p192 = scmp.eq.s32.totalorder %s19, 0
        // Predicated region
        $region41: #{tpu_custom_call.1} parent=31 // pred_check
          %p193 = pneg %p192
        $region42: #{tpu_custom_call.1} parent=31 // pred_check_branch
          %195 = sbr.rel (%p193) target = $region44
        $region43: #{tpu_custom_call.1} parent=31 // pred_region
          %s196 = scalar_lea.smem [#allocation2], 0
          %197 = sst [smem:[%s196]] 0.0
        $region44: #{tpu_custom_call.1} parent=31 // pred_fallthru
          _
        %v198 = vld [vmem:[#allocation3] sm:$0xff]
        %v199 = vld [vmem:[#allocation3 + $0x8] sm:$0xff]
        %v200 = vld [vmem:[%s173] sm:$0xff]
        %v201 = vld [vmem:[%s173 + $0x8] sm:$0xff]
        %v202 = vld [vmem:[%s173 + $0x10] sm:$0xff]
        %v203 = vld [vmem:[%s173 + $0x18] sm:$0xff]
        %v204 = vld [vmem:[%s173 + $0x20] sm:$0xff]
        %v205 = vld [vmem:[%s173 + $0x28] sm:$0xff]
        %v206 = vld [vmem:[%s173 + $0x30] sm:$0xff]
        %v207 = vld [vmem:[%s173 + $0x38] sm:$0xff]
        %v208 = vld [vmem:[%s173 + $0x40] sm:$0xff]
        %v209 = vld [vmem:[%s173 + $0x48] sm:$0xff]
        %v210 = vld [vmem:[%s173 + $0x50] sm:$0xff]
        %v211 = vld [vmem:[%s173 + $0x58] sm:$0xff]
        %v212 = vld [vmem:[%s173 + $0x60] sm:$0xff]
        %v213 = vld [vmem:[%s173 + $0x68] sm:$0xff]
        %v214 = vld [vmem:[%s173 + $0x70] sm:$0xff]
        %v215 = vld [vmem:[%s173 + $0x78] sm:$0xff]
        %v216 = vld [vmem:[%s173 + $0x80] sm:$0xff]
        %v217 = vld [vmem:[%s173 + $0x88] sm:$0xff]
        %v218 = vld [vmem:[%s173 + $0x90] sm:$0xff]
        %v219 = vld [vmem:[%s173 + $0x98] sm:$0xff]
        %v220 = vld [vmem:[%s173 + $0xa0] sm:$0xff]
        %v221 = vld [vmem:[%s173 + $0xa8] sm:$0xff]
        %v222 = vld [vmem:[%s173 + $0xb0] sm:$0xff]
        %v223 = vld [vmem:[%s173 + $0xb8] sm:$0xff]
        %v224 = vld [vmem:[%s173 + $0xc0] sm:$0xff]
        %v225 = vld [vmem:[%s173 + $0xc8] sm:$0xff]
        %v226 = vld [vmem:[%s173 + $0xd0] sm:$0xff]
        %v227 = vld [vmem:[%s173 + $0xd8] sm:$0xff]
        %v228 = vld [vmem:[%s173 + $0xe0] sm:$0xff]
        %v229 = vld [vmem:[%s173 + $0xe8] sm:$0xff]
        %v230 = vld [vmem:[%s173 + $0xf0] sm:$0xff]
        %v231 = vld [vmem:[%s173 + $0xf8] sm:$0xff]
        %v232 = vld [vmem:[%s173 + $0x100] sm:$0xff]
        %v233 = vld [vmem:[%s173 + $0x108] sm:$0xff]
        %v234 = vld [vmem:[%s173 + $0x110] sm:$0xff]
        %v235 = vld [vmem:[%s173 + $0x118] sm:$0xff]
        %v236 = vld [vmem:[%s173 + $0x120] sm:$0xff]
        %v237 = vld [vmem:[%s173 + $0x128] sm:$0xff]
        %v238 = vld [vmem:[%s173 + $0x130] sm:$0xff]
        %v239 = vld [vmem:[%s173 + $0x138] sm:$0xff]
        %v240 = vld [vmem:[%s173 + $0x140] sm:$0xff]
        %v241 = vld [vmem:[%s173 + $0x148] sm:$0xff]
        %v242 = vld [vmem:[%s173 + $0x150] sm:$0xff]
        %v243 = vld [vmem:[%s173 + $0x158] sm:$0xff]
        %v244 = vld [vmem:[%s173 + $0x160] sm:$0xff]
        %v245 = vld [vmem:[%s173 + $0x168] sm:$0xff]
        %v246 = vld [vmem:[%s173 + $0x170] sm:$0xff]
        %v247 = vld [vmem:[%s173 + $0x178] sm:$0xff]
        %v248 = vld [vmem:[%s173 + $0x180] sm:$0xff]
        %v249 = vld [vmem:[%s173 + $0x188] sm:$0xff]
        %v250 = vld [vmem:[%s173 + $0x190] sm:$0xff]
        %v251 = vld [vmem:[%s173 + $0x198] sm:$0xff]
        %v252 = vld [vmem:[%s173 + $0x1a0] sm:$0xff]
        %v253 = vld [vmem:[%s173 + $0x1a8] sm:$0xff]
        %v254 = vld [vmem:[%s173 + $0x1b0] sm:$0xff]
        %v255 = vld [vmem:[%s173 + $0x1b8] sm:$0xff]
        %v256 = vld [vmem:[%s173 + $0x1c0] sm:$0xff]
        %v257 = vld [vmem:[%s173 + $0x1c8] sm:$0xff]
        %v258 = vld [vmem:[%s173 + $0x1d0] sm:$0xff]
        %v259 = vld [vmem:[%s173 + $0x1d8] sm:$0xff]
        %v260 = vld [vmem:[%s173 + $0x1e0] sm:$0xff]
        %v261 = vld [vmem:[%s173 + $0x1e8] sm:$0xff]
        %v262 = vld [vmem:[%s173 + $0x1f0] sm:$0xff]
        %v263 = vld [vmem:[%s173 + $0x1f8] sm:$0xff]
        %v264 = vld [vmem:[%s2] sm:$0xff]
        %265 = vmatprep.subr.mxu0 %v231
        %266 = vmatpush1.xpose.msra.mxu0 %v230
        %267 = vmatprep.subr.mxu0 %v229
        %268 = vmatpush1.xpose.msra.mxu0 %v228
        %269 = vmatprep.subr.mxu0 %v227
        %270 = vmatpush1.xpose.msra.mxu0 %v226
        %271 = vmatprep.subr.mxu0 %v225
        %272 = vmatpush1.xpose.msra.mxu0 %v224
        %273 = vmatprep.subr.mxu0 %v223
        %274 = vmatpush1.xpose.msra.mxu0 %v222
        %275 = vmatprep.subr.mxu0 %v221
        %276 = vmatpush1.xpose.msra.mxu0 %v220
        %277 = vmatprep.subr.mxu0 %v219
        %278 = vmatpush1.xpose.msra.mxu0 %v218
        %279 = vmatprep.subr.mxu0 %v217
        %280 = vmatpush1.xpose.msra.mxu0 %v216
        %281 = vmatprep.subr.mxu0 %v215
        %282 = vmatpush1.xpose.msra.mxu0 %v214
        %283 = vmatprep.subr.mxu0 %v213
        %284 = vmatpush1.xpose.msra.mxu0 %v212
        %285 = vmatprep.subr.mxu0 %v211
        %286 = vmatpush1.xpose.msra.mxu0 %v210
        %287 = vmatprep.subr.mxu0 %v209
        %288 = vmatpush1.xpose.msra.mxu0 %v208
        %289 = vmatprep.subr.mxu0 %v207
        %290 = vmatpush1.xpose.msra.mxu0 %v206
        %291 = vmatprep.subr.mxu0 %v205
        %292 = vmatpush1.xpose.msra.mxu0 %v204
        %293 = vmatprep.subr.mxu0 %v203
        %294 = vmatpush1.xpose.msra.mxu0 %v202
        %295 = vmatprep.subr.mxu0 %v201
        %296 = vmatpush1.xpose.msra.mxu0 %v200
        %297 = vmatprep.subr.mxu0 %v263
        %298 = vmatpush2.xpose.msra.mxu0 %v262
        %299 = vmatprep.subr.mxu0 %v261
        %300 = vmatpush2.xpose.msra.mxu0 %v260
        %301 = vmatprep.subr.mxu0 %v259
        %302 = vmatpush2.xpose.msra.mxu0 %v258
        %303 = vmatprep.subr.mxu0 %v257
        %304 = vmatpush2.xpose.msra.mxu0 %v256
        %305 = vmatprep.subr.mxu0 %v255
        %306 = vmatpush2.xpose.msra.mxu0 %v254
        %307 = vmatprep.subr.mxu0 %v253
        %308 = vmatpush2.xpose.msra.mxu0 %v252
        %309 = vmatprep.subr.mxu0 %v251
        %310 = vmatpush2.xpose.msra.mxu0 %v250
        %311 = vmatprep.subr.mxu0 %v249
        %312 = vmatpush2.xpose.msra.mxu0 %v248
        %313 = vmatprep.subr.mxu0 %v247
        %314 = vmatpush2.xpose.msra.mxu0 %v246
        %315 = vmatprep.subr.mxu0 %v245
        %316 = vmatpush2.xpose.msra.mxu0 %v244
        %317 = vmatprep.subr.mxu0 %v243
        %318 = vmatpush2.xpose.msra.mxu0 %v242
        %319 = vmatprep.subr.mxu0 %v241
        %320 = vmatpush2.xpose.msra.mxu0 %v240
        %321 = vmatprep.subr.mxu0 %v239
        %322 = vmatpush2.xpose.msra.mxu0 %v238
        %323 = vmatprep.subr.mxu0 %v237
        %324 = vmatpush2.xpose.msra.mxu0 %v236
        %325 = vmatprep.subr.mxu0 %v235
        %326 = vmatpush2.xpose.msra.mxu0 %v234
        %327 = vmatprep.subr.mxu0 %v233
        %328 = vmatpush2.xpose.msra.mxu0 %v232
        %329 = vmatprep.mubr.f32.mxu0 %v199
        %330 = vmatmul.mubr.f32.gmra.mxu0 %v198
        %v331 = vpop.f32.mrf.mxu0
        %v332 = vadd.f32 0.0, %v331
        %v333 = vpop.f32.mrf.mxu0
        %v334 = vadd.f32 0.0, %v333
        %335 = vdwg.mxu0
        %v336 = vmul.f32 %v198, %v198
        %v337 = vmul.f32 %v199, %v199
        %v338 = vadd.f32 %v336, %v337
        %339 = vadd.xlane.f32.xlu0 %v338
        %v340 = vpop.xlane.xlu0 %339
        %v341 = vmul.f32 %v200, %v200
        %v342 = vmul.f32 %v201, %v201
        %v343 = vmul.f32 %v202, %v202
        %v344 = vmul.f32 %v203, %v203
        %v345 = vmul.f32 %v204, %v204
        %v346 = vmul.f32 %v205, %v205
        %v347 = vmul.f32 %v206, %v206
        %v348 = vmul.f32 %v207, %v207
        %v349 = vmul.f32 %v208, %v208
        %v350 = vmul.f32 %v209, %v209
        %v351 = vmul.f32 %v210, %v210
        %v352 = vmul.f32 %v211, %v211
        %v353 = vmul.f32 %v212, %v212
        %v354 = vmul.f32 %v213, %v213
        %v355 = vmul.f32 %v214, %v214
        %v356 = vmul.f32 %v215, %v215
        %v357 = vmul.f32 %v216, %v216
        %v358 = vmul.f32 %v217, %v217
        %v359 = vmul.f32 %v218, %v218
        %v360 = vmul.f32 %v219, %v219
        %v361 = vmul.f32 %v220, %v220
        %v362 = vmul.f32 %v221, %v221
        %v363 = vmul.f32 %v222, %v222
        %v364 = vmul.f32 %v223, %v223
        %v365 = vmul.f32 %v224, %v224
        %v366 = vmul.f32 %v225, %v225
        %v367 = vmul.f32 %v226, %v226
        %v368 = vmul.f32 %v227, %v227
        %v369 = vmul.f32 %v228, %v228
        %v370 = vmul.f32 %v229, %v229
        %v371 = vmul.f32 %v230, %v230
        %v372 = vmul.f32 %v231, %v231
        %v373 = vmul.f32 %v232, %v232
        %v374 = vmul.f32 %v233, %v233
        %v375 = vmul.f32 %v234, %v234
        %v376 = vmul.f32 %v235, %v235
        %v377 = vmul.f32 %v236, %v236
        %v378 = vmul.f32 %v237, %v237
        %v379 = vmul.f32 %v238, %v238
        %v380 = vmul.f32 %v239, %v239
        %v381 = vmul.f32 %v240, %v240
        %v382 = vmul.f32 %v241, %v241
        %v383 = vmul.f32 %v242, %v242
        %v384 = vmul.f32 %v243, %v243
        %v385 = vmul.f32 %v244, %v244
        %v386 = vmul.f32 %v245, %v245
        %v387 = vmul.f32 %v246, %v246
        %v388 = vmul.f32 %v247, %v247
        %v389 = vmul.f32 %v248, %v248
        %v390 = vmul.f32 %v249, %v249
        %v391 = vmul.f32 %v250, %v250
        %v392 = vmul.f32 %v251, %v251
        %v393 = vmul.f32 %v252, %v252
        %v394 = vmul.f32 %v253, %v253
        %v395 = vmul.f32 %v254, %v254
        %v396 = vmul.f32 %v255, %v255
        %v397 = vmul.f32 %v256, %v256
        %v398 = vmul.f32 %v257, %v257
        %v399 = vmul.f32 %v258, %v258
        %v400 = vmul.f32 %v259, %v259
        %v401 = vmul.f32 %v260, %v260
        %v402 = vmul.f32 %v261, %v261
        %v403 = vmul.f32 %v262, %v262
        %v404 = vmul.f32 %v263, %v263
        %405 = vmatprep.subr.mxu0 %v372
        %406 = vmatpush1.xpose.msra.mxu0 %v371
        %407 = vmatprep.subr.mxu0 %v370
        %408 = vmatpush1.xpose.msra.mxu0 %v369
        %409 = vmatprep.subr.mxu0 %v368
        %410 = vmatpush1.xpose.msra.mxu0 %v367
        %411 = vmatprep.subr.mxu0 %v366
        %412 = vmatpush1.xpose.msra.mxu0 %v365
        %413 = vmatprep.subr.mxu0 %v364
        %414 = vmatpush1.xpose.msra.mxu0 %v363
        %415 = vmatprep.subr.mxu0 %v362
        %416 = vmatpush1.xpose.msra.mxu0 %v361
        %417 = vmatprep.subr.mxu0 %v360
        %418 = vmatpush1.xpose.msra.mxu0 %v359
        %419 = vmatprep.subr.mxu0 %v358
        %420 = vmatpush1.xpose.msra.mxu0 %v357
        %421 = vmatprep.subr.mxu0 %v356
        %422 = vmatpush1.xpose.msra.mxu0 %v355
        %423 = vmatprep.subr.mxu0 %v354
        %424 = vmatpush1.xpose.msra.mxu0 %v353
        %425 = vmatprep.subr.mxu0 %v352
        %426 = vmatpush1.xpose.msra.mxu0 %v351
        %427 = vmatprep.subr.mxu0 %v350
        %428 = vmatpush1.xpose.msra.mxu0 %v349
        %429 = vmatprep.subr.mxu0 %v348
        %430 = vmatpush1.xpose.msra.mxu0 %v347
        %431 = vmatprep.subr.mxu0 %v346
        %432 = vmatpush1.xpose.msra.mxu0 %v345
        %433 = vmatprep.subr.mxu0 %v344
        %434 = vmatpush1.xpose.msra.mxu0 %v343
        %435 = vmatprep.subr.mxu0 %v342
        %436 = vmatpush1.xpose.msra.mxu0 %v341
        %437 = vmatprep.subr.mxu0 %v404
        %438 = vmatpush2.xpose.msra.mxu0 %v403
        %439 = vmatprep.subr.mxu0 %v402
        %440 = vmatpush2.xpose.msra.mxu0 %v401
        %441 = vmatprep.subr.mxu0 %v400
        %442 = vmatpush2.xpose.msra.mxu0 %v399
        %443 = vmatprep.subr.mxu0 %v398
        %444 = vmatpush2.xpose.msra.mxu0 %v397
        %445 = vmatprep.subr.mxu0 %v396
        %446 = vmatpush2.xpose.msra.mxu0 %v395
        %447 = vmatprep.subr.mxu0 %v394
        %448 = vmatpush2.xpose.msra.mxu0 %v393
        %449 = vmatprep.subr.mxu0 %v392
        %450 = vmatpush2.xpose.msra.mxu0 %v391
        %451 = vmatprep.subr.mxu0 %v390
        %452 = vmatpush2.xpose.msra.mxu0 %v389
        %453 = vmatprep.subr.mxu0 %v388
        %454 = vmatpush2.xpose.msra.mxu0 %v387
        %455 = vmatprep.subr.mxu0 %v386
        %456 = vmatpush2.xpose.msra.mxu0 %v385
        %457 = vmatprep.subr.mxu0 %v384
        %458 = vmatpush2.xpose.msra.mxu0 %v383
        %459 = vmatprep.subr.mxu0 %v382
        %460 = vmatpush2.xpose.msra.mxu0 %v381
        %461 = vmatprep.subr.mxu0 %v380
        %462 = vmatpush2.xpose.msra.mxu0 %v379
        %463 = vmatprep.subr.mxu0 %v378
        %464 = vmatpush2.xpose.msra.mxu0 %v377
        %465 = vmatprep.subr.mxu0 %v376
        %466 = vmatpush2.xpose.msra.mxu0 %v375
        %467 = vmatprep.subr.mxu0 %v374
        %468 = vmatpush2.xpose.msra.mxu0 %v373
        %469 = vmatprep.mubr.f32.mxu0 1.0
        %470 = vmatmul.mubr.f32.gmra.mxu0 1.0
        %v471 = vpop.f32.mrf.mxu0
        %v472 = vadd.f32 0.0, %v471
        %v473 = vpop.f32.mrf.mxu0
        %v474 = vadd.f32 0.0, %v473
        %475 = vdwg.mxu0
        %v476 = vlaneseq
        %v477 = vshrl.u32 %v476, 7
        %v478 = vsub.s32 0, %v477
        %v479 = vrot.slane %v472, %v478
        %v480 = vlaneseq
        %v481 = vshrl.u32 %v480, 7
        %v482 = vsub.s32 0, %v481
        %v483 = vrot.slane %v474, %v482
        %v484 = vadd.f32 %v340, %v479
        %v485 = vadd.f32 %v340, %v483
        %v486 = vmul.f32 %v332, 2.0
        %v487 = vmul.f32 %v334, 2.0
        %v488 = vsub.f32 %v484, %v486
        %v489 = vsub.f32 %v485, %v487
        %v490 = vmax.f32 %v488, 1e-12
        %v491 = vmax.f32 %v489, 1e-12
        %v492 = vmin.f32 %v490, 1e+12
        %v493 = vmin.f32 %v491, 1e+12
        %v494 = vlaneseq
        %v495 = vand.u32 %v494, 127
        %v496 = vadd.s32 %v495, 128
        %s497 = smul.u32 %s19, 256
        %v498 = vstv %s497
        %v499 = vadd.s32 %v495, %v498
        %v500 = vadd.s32 %v496, %v498
        %501 = vset.pattern.permute.xlu0 0
        %502 = vperm.xlu0 %501, %v264
        %v503 = vpop.permute.xlu0 %502
        %vm504 = vcmp.eq.s32.totalorder %v503, %v499
        %vm505 = vcmp.eq.s32.totalorder %v503, %v500
        %v506 = vsel %vm504, 0.0, %v492
        %v507 = vsel %vm505, 0.0, %v493
        %s508 = sld [smem:[#allocation2]]
        %v509 = vadd.f32 %v506, %v507
        %510 = vadd.xlane.f32.xlu0 %v509
        %v511 = vpop.xlane.xlu0 %510
        %v512 = vrot.slane %v511, 4
        %v513 = vadd.f32 %v511, %v512
        %v514 = vrot.slane %v513, 2
        %v515 = vadd.f32 %v513, %v514
        %v516 = vrot.slane %v515, 1
        %v517 = vadd.f32 %v515, %v516
        %s518 = vtos %v517
        %s519 = sadd.f32 %s508, %s518
        %s520 = scalar_lea.smem [#allocation2], 0
        %521 = sst [smem:[%s520]] %s519
        %p522 = scmp.eq.s32.totalorder %s19, 1
        // Predicated region
        $region45: #{tpu_custom_call.1} parent=31 // pred_check
          %p523 = pneg %p522
        $region46: #{tpu_custom_call.1} parent=31 // pred_check_branch
          %525 = sbr.rel (%p523) target = $region48
        $region47: #{tpu_custom_call.1} parent=31 // pred_region
          %s526 = sld [smem:[#allocation2]]
          %v527 = vrcp.pop 4088.0
          %s528 = vtos %v527
          %s529 = smul.f32 %s526, %s528
          %s530 = scalar_lea.smem [#allocation8], 0
          %531 = sst [smem:[%s530]] %s529
        $region48: #{tpu_custom_call.1} parent=31 // pred_fallthru
          _
        // Predicated region
        $region49: #{tpu_custom_call.1} parent=31 // pred_check
          %p532 = pneg %p100
        $region50: #{tpu_custom_call.1} parent=31 // pred_check_branch
          %534 = sbr.rel (%p532) target = $region52
        $region51: #{tpu_custom_call.1} parent=31 // pred_region
          %s536 = ssub.s32 16, 16
          %537 = vsyncadd [#allocation5], %s536
          %540 = dma.smem_to_hbm [#allocation8], 16, %s3, [#allocation5]
        $region52: #{tpu_custom_call.1} parent=31 // pred_fallthru
          _
        // Predicated region
        $region53: #{tpu_custom_call.1} parent=31 // pred_check
          %p541 = pneg %p100
        $region54: #{tpu_custom_call.1} parent=31 // pred_check_branch
          %543 = sbr.rel (%p541) target = $region56
        $region55: #{tpu_custom_call.1} parent=31 // pred_region
          %544 = dma.done [#allocation5], 16
        $region56: #{tpu_custom_call.1} parent=31 // pred_fallthru
          _
        %545 = sfence
      $region32: #{tpu_custom_call.1} parent=5 // pred_fallthru
        _
      %p546 = scmp.le.s32.totalorder 2, %s14
      // Predicated region
      $region57: #{tpu_custom_call.1} parent=5 // pred_check
        %p547 = pneg %p546
      $region58: #{tpu_custom_call.1} parent=5 // pred_check_branch
        %549 = sbr.rel (%p547) target = $region60
      $region59: #{tpu_custom_call.1} parent=5 // pred_region
        %s550 = ssub.s32 %s14, 2
      $region60: #{tpu_custom_call.1} parent=5 // pred_fallthru
        _
    $region6: #{tpu_custom_call.1} parent=1 // loop_footer
      %s18 = sadd.s32 1, %s14
    $region7: #{tpu_custom_call.1} parent=1 // loop_footer_branch
      %13 = sbr.rel target = $region3
    $region8: #{tpu_custom_call.1} parent=1 // loop_exit
      _
    %551 = vsyncpa [#allocation4], 1
    %s552 = scalar_lea.sflag [#allocation4], 1
    %553 = vsyncpa %s552, 1
    %554 = vsyncpa [#allocation7], 1
    %s555 = scalar_lea.sflag [#allocation7], 1
    %556 = vsyncpa %s555, 1
    %557 = vsyncpa [#allocation5], 1
    %s558 = scalar_lea.sflag [#allocation5], 1
    %559 = vsyncpa %s558, 1

</llo_original>
